<compile_context>
chip_gen: v5e
topology: v5e:2x2
jax: 0.10.0
libtpu: 0.0.40
codegen_flags: <defaults>
</compile_context>

<pallas_src>
import jax
import jax.numpy as jnp
from jax.experimental import pallas as pl
from jax.experimental.pallas import tpu as pltpu

_NEG = -1.0e30
_VMEM_BUDGET = 56 * 1024 * 1024  # conservative: under v7x's 64 MiB physical VMEM


def _round_up(x, m):
    return ((x + m - 1) // m) * m


def _vmem_bytes(tile_n, d, fp, nb):
    # Pallas double-buffers every BlockSpec'd operand by default.
    stream = tile_n * (d * 2 + nb * 4 + 4)     # u (bf16) + one_hot (f32) + ls (f32)
    resident = d * fp * 2 + nb * fp * 4        # vT (bf16) + bias (f32), grid-invariant
    out = tile_n * fp * 4                      # mu (f32)
    return 2 * (stream + resident + out)


# ----------------------------- Pallas kernel ------------------------------ #
def _nb_dot_kernel(u_ref, vT_ref, oh_ref, bias_ref, ls_ref, mu_ref):
    # logits = u @ v^T  (bf16 operands, f32 accumulation on the MXU)
    logits = jnp.dot(u_ref[...], vT_ref[...], preferred_element_type=jnp.float32)
    # + per-batch bias gathered via a tiny one-hot matmul; padded feature
    #   columns of bias hold -1e30 so they vanish in the softmax.
    logits = logits + jnp.dot(oh_ref[...], bias_ref[...],
                              preferred_element_type=jnp.float32)

    # softmax over features (dim=1), scaled by library size -> NB mean
    m = jnp.max(logits, axis=-1, keepdims=True)
    e = jnp.exp(logits - m)
    denom = jnp.sum(e, axis=-1, keepdims=True)
    # reciprocal on the (otherwise idle) EUP slot; fold ls into the (tile_n,1) factor
    mu_ref[...] = e * (ls_ref[...] * pl.reciprocal(denom, approx=True))


def nb_dot_decoder(u, v_k, onehot_b, bias, ls, *, tile_n=256):
    """Fused NB dot-decoder mean for one modality. Returns mu of shape (N, F_k)."""
    N, D = u.shape
    F = v_k.shape[0]
    nb = onehot_b.shape[1]

    # lane-dense feature dimension (multiple of 128)
    Fp = _round_up(F, 128)

    # choose the row tile: big (default 256) but clamped to N and the VMEM budget
    tile_n = min(_round_up(tile_n, 8), _round_up(N, 8))
    while tile_n > 8 and _vmem_bytes(tile_n, D, Fp, nb) > _VMEM_BUDGET:
        tile_n = _round_up(tile_n // 2, 8)
    Np = _round_up(N, tile_n)

    # pad rows (samples)
    if Np != N:
        pad_n = Np - N
        u = jnp.pad(u, ((0, pad_n), (0, 0)))
        onehot_b = jnp.pad(onehot_b, ((0, pad_n), (0, 0)))
        ls = jnp.pad(ls, ((0, pad_n), (0, 0)))

    # pad features: zeros for v, -1e30 for bias -> padded logits == -1e30 -> exp == 0
    vT = v_k.T  # (D, F)
    if Fp != F:
        vT = jnp.pad(vT, ((0, 0), (0, Fp - F)))
        bias = jnp.pad(bias, ((0, 0), (0, Fp - F)), constant_values=_NEG)

    u_bf = u.astype(jnp.bfloat16)
    vT_bf = vT.astype(jnp.bfloat16)
    onehot_b = onehot_b.astype(jnp.float32)
    bias = bias.astype(jnp.float32)
    ls = ls.astype(jnp.float32)

    est = _vmem_bytes(tile_n, D, Fp, nb)
    vmem_limit = int(min(max(2 * est + (1 << 20), 32 << 20), 64 << 20))

    mu = pl.pallas_call(
        _nb_dot_kernel,
        out_shape=jax.ShapeDtypeStruct((Np, Fp), jnp.float32),
        grid_spec=pltpu.PrefetchScalarGridSpec(
            num_scalar_prefetch=0,
            grid=(Np // tile_n,),
            in_specs=[
                pl.BlockSpec((tile_n, D), lambda i: (i, 0)),    # u rows (bf16)
                pl.BlockSpec((D, Fp), lambda i: (0, 0)),        # v_k^T, grid-invariant
                pl.BlockSpec((tile_n, nb), lambda i: (i, 0)),   # one-hot blabel
                pl.BlockSpec((nb, Fp), lambda i: (0, 0)),       # per-batch bias
                pl.BlockSpec((tile_n, 1), lambda i: (i, 0)),    # library size
            ],
            out_specs=pl.BlockSpec((tile_n, Fp), lambda i: (i, 0)),
        ),
        compiler_params=pltpu.CompilerParams(
            dimension_semantics=("parallel",),      # shards rows across TCs (v7x)
            vmem_limit_bytes=vmem_limit),
    )(u_bf, vT_bf, onehot_b, bias, ls)
    return mu[:N, :F]


# ------------------------------ JAX glue ----------------------------------- #
def split_v(v, feat_dims):
    vs, start = {}, 0
    for k, ndim in feat_dims.items():
        vs[k] = v[start:start + ndim, :]
        start += ndim
    return vs


class DotMultiModalDecoderPallas:
    """DotMultiModalDecoder with pre_mlp=None, distributions='nb', style='batch'."""

    def __init__(self, outcs, nbatch, key, *, tile_n=256):
        self.outcs = dict(outcs)
        self.nbatch = nbatch
        self.tile_n = tile_n
        self.params = {}
        for k, f in outcs.items():
            key, k1, k2 = jax.random.split(key, 3)
            self.params[k] = dict(
                bias=0.1 * jax.random.normal(k1, (nbatch, f), jnp.float32),
                log_theta=0.1 * jax.random.normal(k2, (nbatch, f), jnp.float32),
            )

    def forward(self, batch, enc_res):
        u = enc_res["zsample"]
        v = enc_res["vsample"]
        vs = split_v(v, self.outcs)
        blabel = batch["blabel"]
        onehot = jax.nn.one_hot(blabel, self.nbatch, dtype=jnp.float32)
        res_d = {}
        for k in self.outcs:
            p = self.params[k]
            # library size precomputed here: stream (N,1), not the full counts matrix
            ls = jnp.sum(batch["output"][k], axis=1, keepdims=True)
            mu = nb_dot_decoder(u, vs[k], onehot, p["bias"], ls, tile_n=self.tile_n)
            # theta depends only on blabel: plain gather of the exp(log_theta) table
            theta = jnp.take(jnp.exp(p["log_theta"]), blabel, axis=0)
            res_d[k] = {"mu": mu, "theta": theta}
        return {"dist": res_d}


# ------------------------------ references --------------------------------- #
def _reference_f32(params, outcs, batch, enc_res):
    """Exact f32 reference matching the PyTorch module."""
    u, v = enc_res["zsample"], enc_res["vsample"]
    vs = split_v(v, outcs)
    blabel = batch["blabel"]
    out = {}
    for k in outcs:
        p = params[k]
        ls = jnp.sum(batch["output"][k], axis=1, keepdims=True)
        logits = u @ vs[k].T + p["bias"][blabel]
        mu = jax.nn.softmax(logits, axis=1) * ls
        theta = jnp.exp(p["log_theta"])[blabel]
        out[k] = (mu, theta)
    return out


def _reference_kernel_numerics(params, outcs, batch, enc_res):
    """Pure-JAX mirror of the kernel's numerics (bf16 matmul, f32 softmax)."""
    u, v = enc_res["zsample"], enc_res["vsample"]
    vs = split_v(v, outcs)
    blabel = batch["blabel"]
    out = {}
    for k in outcs:
        p = params[k]
        ls = jnp.sum(batch["output"][k], axis=1, keepdims=True)
        logits = jnp.dot(u.astype(jnp.bfloat16), vs[k].T.astype(jnp.bfloat16),
                         preferred_element_type=jnp.float32) + p["bias"][blabel]
        mu = jax.nn.softmax(logits, axis=1) * ls
        out[k] = mu
    return out


if __name__ == "__main__":
    key = jax.random.PRNGKey(0)
    N, D, nbatch = 24, 32, 3
    outcs = {"rna": 24, "atac": 40}
    F_tot = sum(outcs.values())

    key, ku, kv, kb, ko1, ko2, kp = jax.random.split(key, 7)
    u = jax.random.normal(ku, (N, D), jnp.float32)                 # zsample
    v = jax.random.normal(kv, (F_tot, D), jnp.float32)             # vsample
    blabel = jax.random.randint(kb, (N,), 0, nbatch)
    counts = {
        "rna": jax.random.uniform(ko1, (N, outcs["rna"]), jnp.float32) * 10.0,
        "atac": jax.random.uniform(ko2, (N, outcs["atac"]), jnp.float32) * 10.0,
    }

    batch = {"blabel": blabel, "output": counts}
    enc_res = {"zsample": u, "vsample": v}

    # tile_n=16 at this toy size exercises a multi-step grid plus row/feature
    # padding; production default is tile_n=256 (auto-shrunk to fit VMEM).
    dec = DotMultiModalDecoderPallas(outcs, nbatch, kp, tile_n=16)
    res = dec.forward(batch, enc_res)
    jax.block_until_ready(res)

    ref_exact = _reference_f32(dec.params, outcs, batch, enc_res)
    ref_match = _reference_kernel_numerics(dec.params, outcs, batch, enc_res)
    for k in outcs:
        mu, theta = res["dist"][k]["mu"], res["dist"][k]["theta"]
        # tight check against a pure-JAX mirror of the kernel's bf16 numerics
        assert jnp.allclose(mu, ref_match[k], atol=1e-3, rtol=5e-3), k
        # loose global check against the exact f32 spec (bf16 matmul inputs)
        rel = jnp.linalg.norm(mu - ref_exact[k][0]) / jnp.linalg.norm(ref_exact[k][0])
        assert rel < 5e-2, (k, float(rel))
        assert jnp.allclose(theta, ref_exact[k][1], atol=1e-5, rtol=1e-5), k

    print("KERNEL_OK")
</pallas_src>

<mosaic_0001>
module attributes {stable_mosaic.version = 11 : i64} {
  func.func @_nb_dot_kernel(%arg0: i32, %arg1: memref<16x32xbf16, #tpu.memory_space<vmem>>, %arg2: memref<32x128xbf16, #tpu.memory_space<vmem>>, %arg3: memref<16x3xf32, #tpu.memory_space<vmem>>, %arg4: memref<3x128xf32, #tpu.memory_space<vmem>>, %arg5: memref<16x1xf32, #tpu.memory_space<vmem>>, %arg6: memref<16x128xf32, #tpu.memory_space<vmem>>) attributes {dimension_semantics = [#tpu.dimension_semantics<parallel>], iteration_bounds = array<i64: 2>, scalar_prefetch = 0 : i64, scratch_operands = 0 : i64, tpu.core_type = #tpu.core_type<tc>, window_params = [{transform_indices = @transform_0, window_bounds = array<i64: 16, 32>}, {pipeline_mode = #tpu.pipeline_mode<synchronous>, transform_indices = @transform_1, window_bounds = array<i64: 32, 128>}, {transform_indices = @transform_2, window_bounds = array<i64: 16, 3>}, {pipeline_mode = #tpu.pipeline_mode<synchronous>, transform_indices = @transform_3, window_bounds = array<i64: 3, 128>}, {transform_indices = @transform_4, window_bounds = array<i64: 16, 1>}, {transform_indices = @transform_5, window_bounds = array<i64: 16, 128>}]} {
    %c0 = arith.constant 0 : index
    %c0_0 = arith.constant 0 : index
    %0 = vector.load %arg1[%c0, %c0_0] : memref<16x32xbf16, #tpu.memory_space<vmem>>, vector<16x32xbf16>
    %c0_1 = arith.constant 0 : index
    %c0_2 = arith.constant 0 : index
    %1 = vector.load %arg2[%c0_1, %c0_2] : memref<32x128xbf16, #tpu.memory_space<vmem>>, vector<32x128xbf16>
    %cst = arith.constant dense<0.000000e+00> : vector<16x128xf32>
    %2 = tpu.matmul %0, %1, %cst {dimension_numbers = #tpu.dot_dimension_numbers<[1], [0], [0], [1], [0, 0, 1, 1], [], []>} : vector<16x32xbf16>, vector<32x128xbf16>, vector<16x128xf32> -> vector<16x128xf32>
    %c0_3 = arith.constant 0 : index
    %c0_4 = arith.constant 0 : index
    %3 = vector.load %arg3[%c0_3, %c0_4] : memref<16x3xf32, #tpu.memory_space<vmem>>, vector<16x3xf32>
    %c0_5 = arith.constant 0 : index
    %c0_6 = arith.constant 0 : index
    %4 = vector.load %arg4[%c0_5, %c0_6] : memref<3x128xf32, #tpu.memory_space<vmem>>, vector<3x128xf32>
    %cst_7 = arith.constant dense<0.000000e+00> : vector<16x128xf32>
    %5 = tpu.matmul %3, %4, %cst_7 {dimension_numbers = #tpu.dot_dimension_numbers<[1], [0], [0], [1], [0, 0, 1, 1], [], []>} : vector<16x3xf32>, vector<3x128xf32>, vector<16x128xf32> -> vector<16x128xf32>
    %6 = arith.addf %2, %5 : vector<16x128xf32>
    %cst_8 = arith.constant dense<0xFF800000> : vector<16xf32>
    %7 = vector.multi_reduction <maximumf>, %6, %cst_8 [1] : vector<16x128xf32> to vector<16xf32>
    %8 = vector.shape_cast %7 : vector<16xf32> to vector<16x1xf32>
    %9 = vector.broadcast %8 : vector<16x1xf32> to vector<16x128xf32>
    %10 = arith.subf %6, %9 : vector<16x128xf32>
    %11 = math.exp %10 : vector<16x128xf32>
    %cst_9 = arith.constant dense<0.000000e+00> : vector<16xf32>
    %12 = vector.multi_reduction <add>, %11, %cst_9 [1] : vector<16x128xf32> to vector<16xf32>
    %13 = vector.shape_cast %12 : vector<16xf32> to vector<16x1xf32>
    %c0_10 = arith.constant 0 : index
    %c0_11 = arith.constant 0 : index
    %14 = vector.load %arg5[%c0_10, %c0_11] : memref<16x1xf32, #tpu.memory_space<vmem>>, vector<16x1xf32>
    %15 = tpu.reciprocal %13 {approx = true} : vector<16x1xf32> -> vector<16x1xf32>
    %16 = arith.mulf %14, %15 : vector<16x1xf32>
    %17 = vector.broadcast %16 : vector<16x1xf32> to vector<16x128xf32>
    %18 = arith.mulf %11, %17 : vector<16x128xf32>
    %c0_12 = arith.constant 0 : index
    %c0_13 = arith.constant 0 : index
    %19 = vector.load %arg6[%c0_12, %c0_13] : memref<16x128xf32, #tpu.memory_space<vmem>>, vector<16x128xf32>
    tpu.vector_store %arg6[%c0_12, %c0_13], %18 {strides = array<i32>} : memref<16x128xf32, #tpu.memory_space<vmem>>, vector<16x128xf32>,
    return
  }
  func.func @transform_0(%arg0: i32) -> (i32, i32) {
    %c0_i32 = arith.constant 0 : i32
    %c0_i32_0 = arith.constant 0 : i32
    return %arg0, %c0_i32 : i32, i32
  }
  func.func @transform_1(%arg0: i32) -> (i32, i32) {
    %c0_i32 = arith.constant 0 : i32
    %c0_i32_0 = arith.constant 0 : i32
    %c0_i32_1 = arith.constant 0 : i32
    return %c0_i32, %c0_i32_0 : i32, i32
  }
  func.func @transform_2(%arg0: i32) -> (i32, i32) {
    %c0_i32 = arith.constant 0 : i32
    %c0_i32_0 = arith.constant 0 : i32
    return %arg0, %c0_i32 : i32, i32
  }
  func.func @transform_3(%arg0: i32) -> (i32, i32) {
    %c0_i32 = arith.constant 0 : i32
    %c0_i32_0 = arith.constant 0 : i32
    %c0_i32_1 = arith.constant 0 : i32
    return %c0_i32, %c0_i32_0 : i32, i32
  }
  func.func @transform_4(%arg0: i32) -> (i32, i32) {
    %c0_i32 = arith.constant 0 : i32
    %c0_i32_0 = arith.constant 0 : i32
    return %arg0, %c0_i32 : i32, i32
  }
  func.func @transform_5(%arg0: i32) -> (i32, i32) {
    %c0_i32 = arith.constant 0 : i32
    %c0_i32_0 = arith.constant 0 : i32
    return %arg0, %c0_i32 : i32, i32
  }
}

</mosaic_0001>

<llo_original>
// kernel: tpu_custom_call.1
$region0: #{tpu_custom_call.1}
  #allocation0 [shape = 'u32[]', space=smem, size = 0x4, offset = 0x4, fixed_abs, tag = 'smem constant byte address 0x4 - core index']
  #allocation1 [shape = 'u32[72,128]{1,0:T(1,128)}', space=vmem, size = 0x9000, scoped, tag = 'internal scratch']
  %s0 = inlined_call_operand.vmem [shape: bf16[32,32], index: 0, kind: input, shape index: {}]
  %s1 = inlined_call_operand.vmem [shape: bf16[32,128], index: 1, kind: input, shape index: {}]
  %s2 = inlined_call_operand.vmem [shape: f32[32,3], index: 2, kind: input, shape index: {}]
  %s3 = inlined_call_operand.vmem [shape: f32[3,128], index: 3, kind: input, shape index: {}]
  %s4 = inlined_call_operand.vmem [shape: f32[32,1], index: 4, kind: input, shape index: {}]
  %s5 = inlined_call_operand.hbm [shape: f32[32,128], index: 5, kind: output, shape index: {}]
  %s6 = sld [smem:[#allocation0]]
  $region53: #{tpu_custom_call.1} parent=0
    _
  %s8 = ssub.s32 1, %s6
  %s9 = scalar_select 0, %s8, %s6
  $region1: #{tpu_custom_call.1} parent=0
    #allocation2 [shape = 'u8[16384]{0}', space=vmem, size = 0x4000, scoped, tag = 'output window, operand 0']
    #allocation3 [shape = 's32[2]{0}', space=sflag, size = 0x8, scoped, tag = 'scoped memory for tpu_custom_call.1']
    %10 = vsyncpa [#allocation3], 0
    %s11 = scalar_lea.sflag [#allocation3], 1
    %12 = vsyncpa %s11, 0
    loop: start=0, step=1, limit=4
    $region2: #{tpu_custom_call.1} parent=1 // loop_pre_header
      _
    $region3: #{tpu_custom_call.1} parent=1 // loop_header
      %s14 = sphi 0, %s18
      %p15 = scmp.ge.s32.totalorder %s14, 4
      %s24 = sphi 0, %s26
      %s27 = sphi 0, %s24
      %s28 = sphi 0, %s27
      %s44 = sphi 0, %s28
      %s48 = sphi 0, %s48
      %s50 = sphi 0, %s48
      %s51 = sphi 0, %s50
      %s65 = sphi 0, %s51
      %s71 = sphi 0, %s73
      %s74 = sphi 0, %s71
      %s75 = sphi 0, %s74
      %s91 = sphi 0, %s75
      %s95 = sphi 0, %s95
      %s97 = sphi 0, %s95
      %s98 = sphi 0, %s97
      %s112 = sphi 0, %s98
      %s118 = sphi 0, %s120
      %s121 = sphi 0, %s118
      %s122 = sphi 0, %s121
      %s138 = sphi 0, %s122
      %s144 = sphi 0, %s146
      %s147 = sphi 0, %s144
      %s148 = sphi 0, %s147
      %s164 = sphi 0, %s148
    $region4: #{tpu_custom_call.1} parent=1 // loop_header_branch
      %17 = sbr.rel (%p15) target = $region8
    $region5: #{tpu_custom_call.1} parent=1 // loop_body
      %s19 = ssub.s32 %s14, 1
      %s20 = ssub.s32 %s14, 2
      %s21 = sadd.s32 %s14, 1
      %s22 = ssub.s32 %s14, %s21
      %p23 = scmp.eq.s32.totalorder %s22, 0
      %s25 = sadd.s32 %s24, 1
      %s26 = scalar_select %p23, %s24, %s25
      %p29 = pneg %p23
      %p30 = scmp.eq.s32.totalorder %s14, 1
      %p31 = por %p29, %p30
      %p32 = scmp.ne.s32.totalorder %s24, %s27
      %p33 = scmp.eq.s32.totalorder %s14, 0
      %p34 = por %p32, %p33
      %p35 = scmp.ne.s32.totalorder %s24, %s27
      %p36 = scmp.eq.s32.totalorder %s19, 1
      %p37 = por %p35, %p36
      %p38 = scmp.ne.s32.totalorder %s27, %s28
      %p39 = scmp.eq.s32.totalorder %s19, 0
      %p40 = por %p38, %p39
      %p41 = scmp.ne.s32.totalorder %s27, %s28
      %p42 = scmp.eq.s32.totalorder %s20, 1
      %p43 = por %p41, %p42
      %p45 = scmp.ne.s32.totalorder %s28, %s44
      %p46 = scmp.eq.s32.totalorder %s20, 0
      %p47 = por %p45, %p46
      %s49 = sadd.s32 %s48, 1
      %p52 = scmp.eq.s32.totalorder %s14, 1
      %p53 = scmp.ne.s32.totalorder %s48, %s50
      %p54 = scmp.eq.s32.totalorder %s14, 0
      %p55 = por %p53, %p54
      %p56 = scmp.ne.s32.totalorder %s48, %s50
      %p57 = scmp.eq.s32.totalorder %s19, 1
      %p58 = por %p56, %p57
      %p59 = scmp.ne.s32.totalorder %s50, %s51
      %p60 = scmp.eq.s32.totalorder %s19, 0
      %p61 = por %p59, %p60
      %p62 = scmp.ne.s32.totalorder %s50, %s51
      %p63 = scmp.eq.s32.totalorder %s20, 1
      %p64 = por %p62, %p63
      %p66 = scmp.ne.s32.totalorder %s51, %s65
      %p67 = scmp.eq.s32.totalorder %s20, 0
      %p68 = por %p66, %p67
      %s69 = ssub.s32 %s14, %s21
      %p70 = scmp.eq.s32.totalorder %s69, 0
      %s72 = sadd.s32 %s71, 1
      %s73 = scalar_select %p70, %s71, %s72
      %p76 = pneg %p70
      %p77 = scmp.eq.s32.totalorder %s14, 1
      %p78 = por %p76, %p77
      %p79 = scmp.ne.s32.totalorder %s71, %s74
      %p80 = scmp.eq.s32.totalorder %s14, 0
      %p81 = por %p79, %p80
      %p82 = scmp.ne.s32.totalorder %s71, %s74
      %p83 = scmp.eq.s32.totalorder %s19, 1
      %p84 = por %p82, %p83
      %p85 = scmp.ne.s32.totalorder %s74, %s75
      %p86 = scmp.eq.s32.totalorder %s19, 0
      %p87 = por %p85, %p86
      %p88 = scmp.ne.s32.totalorder %s74, %s75
      %p89 = scmp.eq.s32.totalorder %s20, 1
      %p90 = por %p88, %p89
      %p92 = scmp.ne.s32.totalorder %s75, %s91
      %p93 = scmp.eq.s32.totalorder %s20, 0
      %p94 = por %p92, %p93
      %s96 = sadd.s32 %s95, 1
      %p99 = scmp.eq.s32.totalorder %s14, 1
      %p100 = scmp.ne.s32.totalorder %s95, %s97
      %p101 = scmp.eq.s32.totalorder %s14, 0
      %p102 = por %p100, %p101
      %p103 = scmp.ne.s32.totalorder %s95, %s97
      %p104 = scmp.eq.s32.totalorder %s19, 1
      %p105 = por %p103, %p104
      %p106 = scmp.ne.s32.totalorder %s97, %s98
      %p107 = scmp.eq.s32.totalorder %s19, 0
      %p108 = por %p106, %p107
      %p109 = scmp.ne.s32.totalorder %s97, %s98
      %p110 = scmp.eq.s32.totalorder %s20, 1
      %p111 = por %p109, %p110
      %p113 = scmp.ne.s32.totalorder %s98, %s112
      %p114 = scmp.eq.s32.totalorder %s20, 0
      %p115 = por %p113, %p114
      %s116 = ssub.s32 %s14, %s21
      %p117 = scmp.eq.s32.totalorder %s116, 0
      %s119 = sadd.s32 %s118, 1
      %s120 = scalar_select %p117, %s118, %s119
      %p123 = pneg %p117
      %p124 = scmp.eq.s32.totalorder %s14, 1
      %p125 = por %p123, %p124
      %p126 = scmp.ne.s32.totalorder %s118, %s121
      %p127 = scmp.eq.s32.totalorder %s14, 0
      %p128 = por %p126, %p127
      %p129 = scmp.ne.s32.totalorder %s118, %s121
      %p130 = scmp.eq.s32.totalorder %s19, 1
      %p131 = por %p129, %p130
      %p132 = scmp.ne.s32.totalorder %s121, %s122
      %p133 = scmp.eq.s32.totalorder %s19, 0
      %p134 = por %p132, %p133
      %p135 = scmp.ne.s32.totalorder %s121, %s122
      %p136 = scmp.eq.s32.totalorder %s20, 1
      %p137 = por %p135, %p136
      %p139 = scmp.ne.s32.totalorder %s122, %s138
      %p140 = scmp.eq.s32.totalorder %s20, 0
      %p141 = por %p139, %p140
      %s142 = ssub.s32 %s14, %s21
      %p143 = scmp.eq.s32.totalorder %s142, 0
      %s145 = sadd.s32 %s144, 1
      %s146 = scalar_select %p143, %s144, %s145
      %p149 = pneg %p143
      %p150 = scmp.eq.s32.totalorder %s14, 1
      %p151 = por %p149, %p150
      %p152 = scmp.ne.s32.totalorder %s144, %s147
      %p153 = scmp.eq.s32.totalorder %s14, 0
      %p154 = por %p152, %p153
      %p155 = scmp.ne.s32.totalorder %s144, %s147
      %p156 = scmp.eq.s32.totalorder %s19, 1
      %p157 = por %p155, %p156
      %p158 = scmp.ne.s32.totalorder %s147, %s148
      %p159 = scmp.eq.s32.totalorder %s19, 0
      %p160 = por %p158, %p159
      %p161 = scmp.ne.s32.totalorder %s147, %s148
      %p162 = scmp.eq.s32.totalorder %s20, 1
      %p163 = por %p161, %p162
      %p165 = scmp.ne.s32.totalorder %s148, %s164
      %p166 = scmp.eq.s32.totalorder %s20, 0
      %p167 = por %p165, %p166
      %p168 = scmp.le.s32.totalorder 1, %s14
      %p169 = scmp.lt.s32.totalorder %s14, 3
      %p170 = pnand %p168, %p169
      %p171 = pneg %p170
      // Predicated region
      $region9: #{tpu_custom_call.1} parent=5 // pred_check
        _
      $region10: #{tpu_custom_call.1} parent=5 // pred_check_branch
        %173 = sbr.rel (%p170) target = $region12
      $region11: #{tpu_custom_call.1} parent=5 // pred_region
        %s174 = ssub.s32 %s14, 1
        // Predicated region
        $region13: #{tpu_custom_call.1} parent=11 // pred_check
          %p175 = pneg %p61
        $region14: #{tpu_custom_call.1} parent=11 // pred_check_branch
          %177 = sbr.rel (%p175) target = $region16
        $region15: #{tpu_custom_call.1} parent=11 // pred_region
          _
        $region16: #{tpu_custom_call.1} parent=11 // pred_fallthru
          _
        // Predicated region
        $region17: #{tpu_custom_call.1} parent=11 // pred_check
          %p178 = pneg %p108
        $region18: #{tpu_custom_call.1} parent=11 // pred_check_branch
          %180 = sbr.rel (%p178) target = $region20
        $region19: #{tpu_custom_call.1} parent=11 // pred_region
          _
        $region20: #{tpu_custom_call.1} parent=11 // pred_fallthru
          _
      $region12: #{tpu_custom_call.1} parent=5 // pred_fallthru
        _
      %p181 = scmp.lt.s32.totalorder %s14, 2
      // Predicated region
      $region21: #{tpu_custom_call.1} parent=5 // pred_check
        %p182 = pneg %p181
      $region22: #{tpu_custom_call.1} parent=5 // pred_check_branch
        %184 = sbr.rel (%p182) target = $region24
      $region23: #{tpu_custom_call.1} parent=5 // pred_region
        // Predicated region
        $region25: #{tpu_custom_call.1} parent=23 // pred_check
          %p185 = pneg %p34
        $region26: #{tpu_custom_call.1} parent=23 // pred_check_branch
          %187 = sbr.rel (%p185) target = $region28
        $region27: #{tpu_custom_call.1} parent=23 // pred_region
          %s188 = smul.u32 2, %s14
          %p189 = scmp.lt.s32.totalorder %s188, 3
          %s190 = scalar_select %p189, %s188, 3
          %s191 = smul.addr %s190, 4
          %s192 = scalar_lea.vmem %s0, %s191
          %s193 = smul.u32 2, %s14
        $region28: #{tpu_custom_call.1} parent=23 // pred_fallthru
          _
        // Predicated region
        $region29: #{tpu_custom_call.1} parent=23 // pred_check
          %p194 = pneg %p81
        $region30: #{tpu_custom_call.1} parent=23 // pred_check_branch
          %196 = sbr.rel (%p194) target = $region32
        $region31: #{tpu_custom_call.1} parent=23 // pred_region
          %s197 = smul.u32 2, %s14
          %p198 = scmp.lt.s32.totalorder %s197, 3
          %s199 = scalar_select %p198, %s197, 3
          %s200 = smul.addr %s199, 8
          %s201 = scalar_lea.vmem %s2, %s200
          %s202 = smul.u32 2, %s14
        $region32: #{tpu_custom_call.1} parent=23 // pred_fallthru
          _
        // Predicated region
        $region33: #{tpu_custom_call.1} parent=23 // pred_check
          %p203 = pneg %p128
        $region34: #{tpu_custom_call.1} parent=23 // pred_check_branch
          %205 = sbr.rel (%p203) target = $region36
        $region35: #{tpu_custom_call.1} parent=23 // pred_region
          %s206 = smul.u32 2, %s14
          %p207 = scmp.lt.s32.totalorder %s206, 3
          %s208 = scalar_select %p207, %s206, 3
          %s209 = smul.addr %s208, 8
          %s210 = scalar_lea.vmem %s4, %s209
          %s211 = smul.u32 2, %s14
        $region36: #{tpu_custom_call.1} parent=23 // pred_fallthru
          _
      $region24: #{tpu_custom_call.1} parent=5 // pred_fallthru
        _
      %p212 = scmp.le.s32.totalorder 1, %s14
      %p213 = scmp.lt.s32.totalorder %s14, 3
      %p214 = pnand %p212, %p213
      %p215 = pneg %p214
      // Predicated region
      $region37: #{tpu_custom_call.1} parent=5 // pred_check
        _
      $region38: #{tpu_custom_call.1} parent=5 // pred_check_branch
        %217 = sbr.rel (%p214) target = $region40
      $region39: #{tpu_custom_call.1} parent=5 // pred_region
        %s218 = ssub.s32 %s14, 1
        %s219 = smul.u32 2, %s19
        %p220 = scmp.lt.s32.totalorder %s219, 3
        %s221 = scalar_select %p220, %s219, 3
        %s222 = smul.addr %s221, 4
        %s223 = scalar_lea.vmem %s0, %s222
        %p224 = pneg %p40
        %p225 = pneg %p37
        %p226 = pneg %p61
        %p227 = pneg %p58
        %s228 = smul.u32 2, %s19
        %p229 = scmp.lt.s32.totalorder %s228, 3
        %s230 = scalar_select %p229, %s228, 3
        %s231 = smul.addr %s230, 8
        %s232 = scalar_lea.vmem %s2, %s231
        %p233 = pneg %p87
        %p234 = pneg %p84
        %p235 = pneg %p108
        %p236 = pneg %p105
        %s237 = smul.u32 2, %s19
        %p238 = scmp.lt.s32.totalorder %s237, 3
        %s239 = scalar_select %p238, %s237, 3
        %s240 = smul.addr %s239, 8
        %s241 = scalar_lea.vmem %s4, %s240
        %p242 = pneg %p134
        %p243 = pneg %p131
        %p244 = pneg %p160
        %p245 = pneg %p157
        %s246 = sand.u32 %s147, 1
        %s247 = scalar_lea.sflag [#allocation3], %s246
        %s248 = sand.u32 %s147, 1
        %s249 = smul.addr %s248, 16
        %s250 = scalar_lea.vmem [#allocation2], %s249
        %s251 = smul.u32 2, %s19
        %p252 = scmp.lt.s32.totalorder %s251, 3
        %s253 = scalar_select %p252, %s251, 3
        %s254 = smul.addr %s253, 4
        %s255 = scalar_lea.vmem %s0, %s254
        %s256 = smul.u32 2, %s19
        %s257 = smul.u32 2, %s19
        %p258 = scmp.lt.s32.totalorder %s257, 3
        %s259 = scalar_select %p258, %s257, 3
        %s260 = smul.addr %s259, 8
        %s261 = scalar_lea.vmem %s2, %s260
        %s262 = smul.u32 2, %s19
        %s263 = smul.u32 2, %s19
        %p264 = scmp.lt.s32.totalorder %s263, 3
        %s265 = scalar_select %p264, %s263, 3
        %s266 = smul.addr %s265, 8
        %s267 = scalar_lea.vmem %s4, %s266
        %s268 = smul.u32 2, %s19
        %s269 = smul.u32 2, %s19
        %v271 = vld [vmem:[%s255] sm:$0xf]
        %v272 = vld [vmem:[%s255 + $0x4] sm:$0xf]
        %v273 = vld [vmem:[%s1] sm:$0xf]
        %v274 = vld [vmem:[%s1 + $0x4] sm:$0xf]
        %v275 = vld [vmem:[%s1 + $0x8] sm:$0xf]
        %v276 = vld [vmem:[%s1 + $0xc] sm:$0xf]
        %v277 = vld [vmem:[%s261] sm:$0xff]
        %v278 = vld [vmem:[%s261 + $0x8] sm:$0xff]
        %v279 = vld [vmem:[%s3] sm:$0x7]
        %vm280 = vcmask 23552
        %v282 = vsel %vm280, %v277, 0
        %v285 = vsel %vm280, %v278, 0
        %vm287 = vcmask 1042432
        %v289 = vsel %vm287, %v279, 0
        %291 = vmatpush.msra.mxu0 0.0
        %292 = vmatpush.msra.mxu0 0.0
        %293 = vmatpush.msra.mxu0 0.0
        %294 = vmatpush.msra.mxu0 0.0
        %295 = vmatpush.msra.mxu0 0.0
        %296 = vmatpush.msra.mxu0 0.0
        %297 = vmatpush.msra.mxu0 0.0
        %298 = vmatpush.msra.mxu0 0.0
        %299 = vmatpush.msra.mxu0 0.0
        %300 = vmatpush.msra.mxu0 0.0
        %301 = vmatpush.msra.mxu0 0.0
        %302 = vmatpush.msra.mxu0 0.0
        %303 = vmatpush.msra.mxu0 0.0
        %304 = vmatpush.msra.mxu0 0.0
        %305 = vmatpush.msra.mxu0 0.0
        %306 = vmatpush.msra.mxu0 %v289
        %307 = vmatmul.f32.gmra.mxu0 %v282
        %v308 = vpop.f32.mrf.mxu0
        %v309 = vadd.f32 0.0, %v308
        %310 = vmatmul.f32.gmra.mxu0 %v285
        %v311 = vpop.f32.mrf.mxu0
        %v312 = vadd.f32 0.0, %v311
        %313 = vdwg.mxu0
        %v316 = vunpack.c.l.b16 %v271
        %v317 = vunpack.c.l.b16 %v272
        %v318 = vpack.c.b16 %v317, %v316
        %v323 = vunpack.c.l.b16 %v273
        %v324 = vunpack.c.l.b16 %v274
        %v325 = vunpack.c.l.b16 %v275
        %v326 = vunpack.c.l.b16 %v276
        %v327 = vpack.c.b16 %v324, %v323
        %v328 = vpack.c.b16 %v326, %v325
        %vm331 = vcmask 261120
        %v333 = vsel %vm331, %v318, 0
        %335 = vmatpush.bf16.msra.mxu0 0
        %336 = vmatpush.bf16.msra.mxu0 0
        %337 = vmatpush.bf16.msra.mxu0 0
        %338 = vmatpush.bf16.msra.mxu0 0
        %339 = vmatpush.bf16.msra.mxu0 0
        %340 = vmatpush.bf16.msra.mxu0 0
        %341 = vmatpush.bf16.msra.mxu0 %v328
        %342 = vmatpush.bf16.msra.mxu0 %v327
        %343 = vmatmul.bf16.gmra.mxu0 %v333
        %v344 = vpop.f32.mrf.mxu0
        %v345 = vadd.f32 %v309, %v344
        %v346 = vpop.f32.mrf.mxu0
        %v347 = vadd.f32 %v312, %v346
        %348 = vdwg.mxu0
        %349 = vmax.xlane.f32.xlu0 %v345
        %v350 = vpop.xlane.xlu0 %349
        %351 = vmax.xlane.f32.xlu0 %v347
        %v352 = vpop.xlane.xlu0 %351
        %v353 = vsub.f32 %v345, %v350
        %v354 = vsub.f32 %v347, %v352
        %v355 = vmul.f32 %v353, 1.442695
        %v356 = vpow.pop %v355
        %v357 = vmul.f32 %v354, 1.442695
        %v358 = vpow.pop %v357
        %359 = vadd.xlane.f32.xlu0 %v356
        %v360 = vpop.xlane.xlu0 %359
        %361 = vadd.xlane.f32.xlu0 %v358
        %v362 = vpop.xlane.xlu0 %361
        %v363 = vld [vmem:[%s267] sm:$0xff]
        %v364 = vld [vmem:[%s267 + $0x8] sm:$0xff]
        %v365 = vrcp.pop %v360
        %v366 = vrcp.pop %v362
        %v367 = vmul.f32 %v363, %v365
        %v368 = vmul.f32 %v364, %v366
        %370 = vset.pattern.permute.xlu0 0
        %371 = vperm.xlu0 %370, %v367
        %v372 = vpop.permute.xlu0 %371
        %375 = vset.pattern.permute.xlu0 0
        %376 = vperm.xlu0 %375, %v368
        %v377 = vpop.permute.xlu0 %376
        %v379 = vmul.f32 %v356, %v372
        %v380 = vmul.f32 %v358, %v377
        %381 = vst [vmem:[%s250] sm:$0xff] %v379
        %382 = vst [vmem:[%s250 + $0x8] sm:$0xff] %v380
        %s383 = sand.u32 %s147, 1
        %s384 = scalar_lea.sflag [#allocation3], %s383
        %s385 = sand.u32 %s147, 1
        %s386 = smul.addr %s385, 16
        %s387 = scalar_lea.vmem [#allocation2], %s386
        // Predicated region
        $region41: #{tpu_custom_call.1} parent=39 // pred_check
          %p388 = pneg %p157
        $region42: #{tpu_custom_call.1} parent=39 // pred_check_branch
          %390 = sbr.rel (%p388) target = $region44
        $region43: #{tpu_custom_call.1} parent=39 // pred_region
          %s391 = smul.u32 2, %s19
          %393 = vsyncadd %s384, 0
          %s394 = smul.addr %s391, 8
          %s395 = scalar_lea.hbm %s5, %s394
          %s396 = sshll.u32 %s387, 4
          %s397 = int_to_ptr.vmem [resolvable:$true] %s396
          %s398 = sshll.u32 %s395, 4
          %s399 = int_to_ptr.hbm [resolvable:$true] %s398
          %404 = dma.vmem_to_hbm [thread:$0]  %s397, 256, %s399, %s384, 128, 128, 8
        $region44: #{tpu_custom_call.1} parent=39 // pred_fallthru
          _
      $region40: #{tpu_custom_call.1} parent=5 // pred_fallthru
        _
      %p405 = scmp.le.s32.totalorder 2, %s14
      // Predicated region
      $region45: #{tpu_custom_call.1} parent=5 // pred_check
        %p406 = pneg %p405
      $region46: #{tpu_custom_call.1} parent=5 // pred_check_branch
        %408 = sbr.rel (%p406) target = $region48
      $region47: #{tpu_custom_call.1} parent=5 // pred_region
        %s409 = ssub.s32 %s14, 2
        // Predicated region
        $region49: #{tpu_custom_call.1} parent=47 // pred_check
          %p410 = pneg %p163
        $region50: #{tpu_custom_call.1} parent=47 // pred_check_branch
          %412 = sbr.rel (%p410) target = $region52
        $region51: #{tpu_custom_call.1} parent=47 // pred_region
          %s413 = sand.u32 %s148, 1
          %s414 = scalar_lea.sflag [#allocation3], %s413
          %s415 = sand.u32 %s148, 1
          %s416 = smul.addr %s415, 16
          %s417 = scalar_lea.vmem [#allocation2], %s416
          %419 = dma.done %s414, 256
        $region52: #{tpu_custom_call.1} parent=47 // pred_fallthru
          _
      $region48: #{tpu_custom_call.1} parent=5 // pred_fallthru
        _
    $region6: #{tpu_custom_call.1} parent=1 // loop_footer
      %s18 = sadd.s32 1, %s14
    $region7: #{tpu_custom_call.1} parent=1 // loop_footer_branch
      %13 = sbr.rel target = $region3
    $region8: #{tpu_custom_call.1} parent=1 // loop_exit
      _
    %420 = vsyncpa [#allocation3], 1
    %s421 = scalar_lea.sflag [#allocation3], 1
    %422 = vsyncpa %s421, 1

</llo_original>
